<compile_context>
chip_gen: v7x
topology: tpu7x:2x2x1
jax: 0.10.0
libtpu: 0.0.40
codegen_flags: <defaults>
</compile_context>

<pallas_src>
import functools

import jax
import jax.numpy as jnp
from jax.experimental import pallas as pl
from jax.experimental.pallas import tpu as pltpu

SMOOTHING = 0.1


def _bce_ls_kernel(x_ref, t_ref, o_ref, acc_ref, *, one_m2s, smoothing,
                   rows, tile_rows, cols, acc_rows, steps_per_split,
                   need_mask, mask_from):
    c = pl.program_id(0)          # parallel split (v7x TensorCores)
    i = pl.program_id(1)          # reduction axis over row tiles

    @pl.when(i == 0)
    def _():
        acc_ref[...] = jnp.zeros_like(acc_ref)

    x = x_ref[...].astype(jnp.float32)
    t = t_ref[...].astype(jnp.float32)

    # label smoothing folded in:  t' = (1-2s)*t + s
    # stable BCE-with-logits:     max(x,0) - x*t' + log1p(exp(-|x|))
    loss = (jnp.maximum(x, 0.0)
            - x * (one_m2s * t + smoothing)
            + jnp.log1p(jnp.exp(-jnp.abs(x))))

    def fold(v):
        # Fold (tile_rows, cols) down to the small (acc_rows, cols) accumulator.
        # The reshape only splits the leading sublane-tiled axis (layout-free);
        # the sum over axis 0 is pure VPU adds, no cross-lane work.
        if tile_rows == acc_rows:
            return v
        return v.reshape(tile_rows // acc_rows, acc_rows, cols).sum(axis=0)

    if need_mask:
        step = c * steps_per_split + i

        @pl.when(step < mask_from)
        def _():  # fast path: fully valid tile — no iota / compare / select
            acc_ref[...] += fold(loss)

        @pl.when(step >= mask_from)
        def _():  # last (possibly ragged) tile and/or grid-padding overshoot
            row_ids = jax.lax.broadcasted_iota(jnp.int32, (tile_rows, cols), 0)
            valid = (step * tile_rows + row_ids) < rows
            # keep as a select (not multiply-by-mask): garbage rows may be NaN
            acc_ref[...] += fold(jnp.where(valid, loss, 0.0))
    else:
        acc_ref[...] += fold(loss)

    @pl.when(i == pl.num_programs(1) - 1)
    def _():
        o_ref[0, 0] = jnp.sum(acc_ref[...])   # single small reduce per split


def _partial_sums(x2, t2, rows, cols, smoothing):
    """Run the Pallas kernel over the (rows, cols) slab; return the loss sum."""
    # ~4 MiB f32 per input block; 2 inputs x 2 pipeline buffers = 16 MiB.
    budget_rows = max(8, ((4 * 1024 * 1024) // (4 * cols)) // 8 * 8)

    if rows <= budget_rows:
        tile_rows = rows
        steps = 1
        if rows > 8:
            # Split one big block into two legal tiles so both v7x TensorCores
            # (and their HBM bandwidth) get work; ~0.35us extra overhead only.
            half = (((rows + 1) // 2) + 7) // 8 * 8
            if half < rows:
                tile_rows = half
                steps = int(pl.cdiv(rows, tile_rows))   # == 2
    else:
        tile_rows = budget_rows
        steps = int(pl.cdiv(rows, tile_rows))

    n_split = 2 if steps >= 2 else 1
    steps_per_split = int(pl.cdiv(steps, n_split))
    padded_steps = n_split * steps_per_split

    ragged = (rows % tile_rows) != 0
    need_clamp = padded_steps != steps          # odd step count padded to even
    need_mask = ragged or need_clamp
    mask_from = (steps - 1) if ragged else steps

    acc_rows = 8 if tile_rows % 8 == 0 else tile_rows

    if need_clamp:
        # Overshoot step re-reads the last real block (clamped) and is fully
        # masked inside the kernel, contributing exactly 0.
        def in_idx(c, i):
            return (jnp.minimum(c * steps_per_split + i, steps - 1), 0)
    else:
        def in_idx(c, i):
            return (c * steps_per_split + i, 0)

    kernel = functools.partial(
        _bce_ls_kernel,
        one_m2s=1.0 - 2.0 * float(smoothing),
        smoothing=float(smoothing),
        rows=rows, tile_rows=tile_rows, cols=cols, acc_rows=acc_rows,
        steps_per_split=steps_per_split,
        need_mask=need_mask, mask_from=mask_from,
    )

    n_elems = rows * cols
    partials = pl.pallas_call(
        kernel,
        out_shape=jax.ShapeDtypeStruct((n_split, 1), jnp.float32),
        grid_spec=pltpu.PrefetchScalarGridSpec(
            num_scalar_prefetch=0,
            grid=(n_split, steps_per_split),
            in_specs=[
                pl.BlockSpec((tile_rows, cols), in_idx),
                pl.BlockSpec((tile_rows, cols), in_idx),
            ],
            out_specs=pl.BlockSpec((1, 1), lambda c, i: (c, 0),
                                   memory_space=pltpu.SMEM),
            scratch_shapes=[pltpu.VMEM((acc_rows, cols), jnp.float32)],
        ),
        compiler_params=pltpu.CompilerParams(
            dimension_semantics=("parallel", "arbitrary"),
            vmem_limit_bytes=40 * 1024 * 1024),
        cost_estimate=pl.CostEstimate(
            flops=8 * n_elems,
            transcendentals=2 * n_elems,
            bytes_accessed=(x2.dtype.itemsize + t2.dtype.itemsize) * n_elems),
    )(x2, t2)
    return jnp.sum(partials)


def bce_with_logits_label_smoothing(logits, targets, smoothing=SMOOTHING):
    assert logits.shape == targets.shape
    total = int(logits.size)

    flat_l = logits.reshape(-1)
    flat_t = targets.reshape(-1)

    # Pick a lane-dense column width that exactly divides the element count so
    # no pad / copy is needed in the common case.
    cols = next((c for c in (512, 256, 128) if total % c == 0), None)

    if cols is not None:
        rows = total // cols
        n_main = total
    else:
        # TODO(synk): truly ragged totals use a 128-aligned prefix in the kernel
        # plus a (<128-element) plain-jnp tail; the prefix slice may copy.
        cols = 128
        rows = total // cols
        n_main = rows * cols

    if rows > 0:
        if n_main == total:
            x2 = flat_l.reshape(rows, cols)
            t2 = flat_t.reshape(rows, cols)
        else:
            x2 = flat_l[:n_main].reshape(rows, cols)
            t2 = flat_t[:n_main].reshape(rows, cols)
        loss_sum = _partial_sums(x2, t2, rows, cols, smoothing)
    else:
        loss_sum = jnp.float32(0.0)

    if n_main != total:
        xt = flat_l[n_main:].astype(jnp.float32)
        tt = flat_t[n_main:].astype(jnp.float32)
        tp = (1.0 - 2.0 * float(smoothing)) * tt + float(smoothing)
        tail = jnp.maximum(xt, 0.0) - xt * tp + jnp.log1p(jnp.exp(-jnp.abs(xt)))
        loss_sum = loss_sum + jnp.sum(tail)

    # mean reduction
    return loss_sum / jnp.float32(total)


def _reference(logits, targets, smoothing=SMOOTHING):
    t = targets * (1.0 - smoothing) + smoothing * (1.0 - targets)
    loss = (
        jnp.maximum(logits, 0.0)
        - logits * t
        + jnp.log1p(jnp.exp(-jnp.abs(logits)))
    )
    return jnp.mean(loss)


if __name__ == "__main__":
    key = jax.random.PRNGKey(0)
    k1, k2 = jax.random.split(key)

    # PyTorch-style NCHW logits and binary targets
    x = jax.random.normal(k1, (2, 4, 16, 16), dtype=jnp.float32)
    targets = (jax.random.uniform(k2, (2, 4, 16, 16)) > 0.5).astype(jnp.float32)

    loss = bce_with_logits_label_smoothing(x, targets)
    loss = jax.block_until_ready(loss)

    ref = _reference(x, targets)
    assert jnp.allclose(loss, ref, atol=1e-5, rtol=1e-5), (loss, ref)

    print("KERNEL_OK")
</pallas_src>

<mosaic_0001>
module attributes {stable_mosaic.version = 11 : i64} {
  func.func @_bce_ls_kernel(%arg0: i32, %arg1: i32, %arg2: memref<4x512xf32, #tpu.memory_space<vmem>>, %arg3: memref<4x512xf32, #tpu.memory_space<vmem>>, %arg4: memref<1x1xf32, #tpu.memory_space<smem>>, %arg5: memref<4x512xf32, #tpu.memory_space<vmem>>) attributes {dimension_semantics = [#tpu.dimension_semantics<parallel>, #tpu.dimension_semantics<arbitrary>], iteration_bounds = array<i64: 1, 1>, scalar_prefetch = 0 : i64, scratch_operands = 1 : i64, tpu.core_type = #tpu.core_type<tc>, window_params = [{transform_indices = @transform_0, window_bounds = array<i64: 4, 512>}, {transform_indices = @transform_1, window_bounds = array<i64: 4, 512>}, {transform_indices = @transform_2, window_bounds = array<i64: 1, 1>}]} {
    %c0_i32 = arith.constant 0 : i32
    %0 = arith.cmpi eq, %arg1, %c0_i32 : i32
    %1 = arith.extui %0 : i1 to i32
    %c0_i32_0 = arith.constant 0 : i32
    %2 = arith.cmpi ne, %1, %c0_i32_0 : i32
    scf.if %2 {
      %cst_13 = arith.constant 0.000000e+00 : f32
      %25 = vector.broadcast %cst_13 : f32 to vector<4x512xf32>
      %c0_14 = arith.constant 0 : index
      %c0_15 = arith.constant 0 : index
      %26 = vector.load %arg5[%c0_14, %c0_15] : memref<4x512xf32, #tpu.memory_space<vmem>>, vector<4x512xf32>
      tpu.vector_store %arg5[%c0_14, %c0_15], %25 {strides = array<i32>} : memref<4x512xf32, #tpu.memory_space<vmem>>, vector<4x512xf32>,
    } else {
    }
    %c0 = arith.constant 0 : index
    %c0_1 = arith.constant 0 : index
    %3 = vector.load %arg2[%c0, %c0_1] : memref<4x512xf32, #tpu.memory_space<vmem>>, vector<4x512xf32>
    %c0_2 = arith.constant 0 : index
    %c0_3 = arith.constant 0 : index
    %4 = vector.load %arg3[%c0_2, %c0_3] : memref<4x512xf32, #tpu.memory_space<vmem>>, vector<4x512xf32>
    %cst = arith.constant 0.000000e+00 : f32
    %5 = vector.broadcast %cst : f32 to vector<4x512xf32>
    %6 = arith.maximumf %3, %5 : vector<4x512xf32>
    %cst_4 = arith.constant 8.000000e-01 : f32
    %7 = vector.broadcast %cst_4 : f32 to vector<4x512xf32>
    %8 = arith.mulf %7, %4 : vector<4x512xf32>
    %cst_5 = arith.constant 1.000000e-01 : f32
    %9 = vector.broadcast %cst_5 : f32 to vector<4x512xf32>
    %10 = arith.addf %8, %9 : vector<4x512xf32>
    %11 = arith.mulf %3, %10 : vector<4x512xf32>
    %12 = arith.subf %6, %11 : vector<4x512xf32>
    %13 = math.absf %3 : vector<4x512xf32>
    %cst_6 = arith.constant 0.000000e+00 : f32
    %14 = vector.broadcast %cst_6 : f32 to vector<4x512xf32>
    %15 = arith.subf %14, %13 : vector<4x512xf32>
    %16 = math.exp %15 : vector<4x512xf32>
    %17 = math.log1p %16 : vector<4x512xf32>
    %18 = arith.addf %12, %17 : vector<4x512xf32>
    %c0_7 = arith.constant 0 : index
    %c0_8 = arith.constant 0 : index
    %19 = vector.load %arg5[%c0_7, %c0_8] : memref<4x512xf32, #tpu.memory_space<vmem>>, vector<4x512xf32>
    %20 = arith.addf %19, %18 : vector<4x512xf32>
    %c0_9 = arith.constant 0 : index
    %c0_10 = arith.constant 0 : index
    %21 = vector.load %arg5[%c0_9, %c0_10] : memref<4x512xf32, #tpu.memory_space<vmem>>, vector<4x512xf32>
    tpu.vector_store %arg5[%c0_9, %c0_10], %20 {strides = array<i32>} : memref<4x512xf32, #tpu.memory_space<vmem>>, vector<4x512xf32>,
    %c0_i32_11 = arith.constant 0 : i32
    %22 = arith.cmpi eq, %arg1, %c0_i32_11 : i32
    %23 = arith.extui %22 : i1 to i32
    %c0_i32_12 = arith.constant 0 : i32
    %24 = arith.cmpi ne, %23, %c0_i32_12 : i32
    scf.if %24 {
      %c0_13 = arith.constant 0 : index
      %c0_14 = arith.constant 0 : index
      %25 = vector.load %arg5[%c0_13, %c0_14] : memref<4x512xf32, #tpu.memory_space<vmem>>, vector<4x512xf32>
      %26 = vector.shape_cast %25 : vector<4x512xf32> to vector<1x4x512xf32>
      %cst_15 = arith.constant dense<0.000000e+00> : vector<1xf32>
      %27 = vector.multi_reduction <add>, %26, %cst_15 [1, 2] : vector<1x4x512xf32> to vector<1xf32>
      %28 = vector.shape_cast %27 : vector<1xf32> to vector<1x1x1xf32>
      %29 = vector.extract %28[0, 0, 0] : f32 from vector<1x1x1xf32>
      %c0_16 = arith.constant 0 : index
      %c0_17 = arith.constant 0 : index
      %30 = memref.load %arg4[%c0_16, %c0_17] : memref<1x1xf32, #tpu.memory_space<smem>>
      memref.store %29, %arg4[%c0_16, %c0_17] : memref<1x1xf32, #tpu.memory_space<smem>>
    } else {
    }
    return
  }
  func.func @transform_0(%arg0: i32, %arg1: i32) -> (i32, i32) {
    %c1_i32 = arith.constant 1 : i32
    %0 = arith.muli %arg0, %c1_i32 : i32
    %1 = arith.addi %0, %arg1 : i32
    %c0_i32 = arith.constant 0 : i32
    %c0_i32_0 = arith.constant 0 : i32
    return %1, %c0_i32 : i32, i32
  }
  func.func @transform_1(%arg0: i32, %arg1: i32) -> (i32, i32) {
    %c1_i32 = arith.constant 1 : i32
    %0 = arith.muli %arg0, %c1_i32 : i32
    %1 = arith.addi %0, %arg1 : i32
    %c0_i32 = arith.constant 0 : i32
    %c0_i32_0 = arith.constant 0 : i32
    return %1, %c0_i32 : i32, i32
  }
  func.func @transform_2(%arg0: i32, %arg1: i32) -> (i32, i32) {
    %c0_i32 = arith.constant 0 : i32
    %c0_i32_0 = arith.constant 0 : i32
    return %arg0, %c0_i32 : i32, i32
  }
}

</mosaic_0001>

<llo_original>
// kernel: tpu_custom_call.1
$region0: #{tpu_custom_call.1}
  #allocation0 [shape = 'u32[]', space=smem, size = 0x4, offset = 0x4, fixed_abs, tag = 'smem constant byte address 0x4 - core index']
  #allocation1 [shape = 'u32[144,128]{1,0:T(1,128)}', space=vmem, size = 0x12000, scoped, tag = 'internal scratch']
  #allocation2 [shape = 'f32[4,512]{1,0:T(4,128)}', space=vmem, size = 0x2000, scoped, tag = 'scratch operand']
  %s0 = inlined_call_operand.hbm [shape: f32[4,512], index: 0, kind: input, shape index: {}]
  %s1 = inlined_call_operand.hbm [shape: f32[4,512], index: 1, kind: input, shape index: {}]
  %s2 = inlined_call_operand.hbm [shape: f32[1,1], index: 2, kind: output, shape index: {}]
  %s3 = sld [smem:[#allocation0]]
  $region34: #{tpu_custom_call.1} parent=0
    _
  %s5 = ssub.s32 1, %s3
  %s6 = scalar_select 0, %s5, %s3
  $region1: #{tpu_custom_call.1} parent=0
    #allocation3 [shape = 'u8[8192]{0}', space=vmem, size = 0x2000, scoped, tag = 'input window, operand 0, single buffered']
    #allocation4 [shape = 's32[1]{0}', space=sflag, size = 0x4, scoped, tag = 'scoped memory for tpu_custom_call.1']
    #allocation5 [shape = 's32[1]{0}', space=sflag, size = 0x4, scoped, tag = 'scoped memory for tpu_custom_call.1']
    #allocation6 [shape = 'u8[8192]{0}', space=vmem, size = 0x2000, scoped, tag = 'input window, operand 1, single buffered']
    #allocation7 [shape = 's32[1]{0}', space=sflag, size = 0x4, scoped, tag = 'scoped memory for tpu_custom_call.1']
    #allocation8 [shape = 'u8[512]{0}', space=smem, size = 0x200, scoped, tag = 'output window, operand 0, single buffered']
    %7 = vsyncpa [#allocation4], 0
    %8 = vsyncpa [#allocation7], 0
    %9 = vsyncpa [#allocation5], 0
    // Predicated region
    $region2: #{tpu_custom_call.1} parent=1 // pred_check
      _
    $region3: #{tpu_custom_call.1} parent=1 // pred_check_branch
      %11 = sbr.rel (0) target = $region5
    $region4: #{tpu_custom_call.1} parent=1 // pred_region
      %s12 = sadd.s32 0, 0
      %s14 = ssub.s32 256, 256
      %15 = vsyncadd [#allocation4], %s14
      %s16 = smul.addr %s12, 4
      %s17 = smul.addr %s16, 64
      %s18 = scalar_lea.hbm %s0, %s17
      %s20 = sshll.u32 [#allocation3], 4
      %s21 = int_to_ptr.vmem [resolvable:$true] %s20
      %23 = dma.hbm_to_vmem [thread:$0]  %s18, 256, %s21, [#allocation4]
    $region5: #{tpu_custom_call.1} parent=1 // pred_fallthru
      _
    // Predicated region
    $region6: #{tpu_custom_call.1} parent=1 // pred_check
      _
    $region7: #{tpu_custom_call.1} parent=1 // pred_check_branch
      %25 = sbr.rel (0) target = $region9
    $region8: #{tpu_custom_call.1} parent=1 // pred_region
      %s26 = sadd.s32 0, 0
      %s28 = ssub.s32 256, 256
      %29 = vsyncadd [#allocation7], %s28
      %s30 = smul.addr %s26, 4
      %s31 = smul.addr %s30, 64
      %s32 = scalar_lea.hbm %s1, %s31
      %s34 = sshll.u32 [#allocation6], 4
      %s35 = int_to_ptr.vmem [resolvable:$true] %s34
      %37 = dma.hbm_to_vmem [thread:$0]  %s32, 256, %s35, [#allocation7]
    $region9: #{tpu_custom_call.1} parent=1 // pred_fallthru
      _
    // Predicated region
    $region10: #{tpu_custom_call.1} parent=1 // pred_check
      _
    $region11: #{tpu_custom_call.1} parent=1 // pred_check_branch
      %39 = sbr.rel (0) target = $region13
    $region12: #{tpu_custom_call.1} parent=1 // pred_region
      %40 = dma.done [#allocation4], 256
    $region13: #{tpu_custom_call.1} parent=1 // pred_fallthru
      _
    // Predicated region
    $region14: #{tpu_custom_call.1} parent=1 // pred_check
      _
    $region15: #{tpu_custom_call.1} parent=1 // pred_check_branch
      %42 = sbr.rel (0) target = $region17
    $region16: #{tpu_custom_call.1} parent=1 // pred_region
      %43 = dma.done [#allocation7], 256
    $region17: #{tpu_custom_call.1} parent=1 // pred_fallthru
      _
    %s44 = sadd.s32 0, 0
    %s45 = sadd.s32 0, 0
    %p46 = scmp.eq.s32.totalorder 0, 0
    // Predicated region
    $region18: #{tpu_custom_call.1} parent=1 // pred_check
      %p47 = pneg %p46
    $region19: #{tpu_custom_call.1} parent=1 // pred_check_branch
      %49 = sbr.rel (%p47) target = $region21
    $region20: #{tpu_custom_call.1} parent=1 // pred_region
      %50 = vst [vmem:[#allocation2] sm:$0xff] 0.0
      %51 = vst [vmem:[#allocation2 + $0x8] sm:$0xff] 0.0
    $region21: #{tpu_custom_call.1} parent=1 // pred_fallthru
      _
    %v52 = vld [vmem:[#allocation3] sm:$0xff]
    %v53 = vld [vmem:[#allocation3 + $0x8] sm:$0xff]
    %v54 = vld [vmem:[#allocation6] sm:$0xff]
    %v55 = vld [vmem:[#allocation6 + $0x8] sm:$0xff]
    %v56 = vmax.f32 %v52, 0.0
    %v57 = vmax.f32 %v53, 0.0
    %v58 = vmul.f32 %v54, 0.8
    %v59 = vmul.f32 %v55, 0.8
    %v60 = vadd.f32 %v58, 0.1
    %v61 = vadd.f32 %v59, 0.1
    %v62 = vmul.f32 %v52, %v60
    %v63 = vmul.f32 %v53, %v61
    %v64 = vsub.f32 %v56, %v62
    %v65 = vsub.f32 %v57, %v63
    %v66 = vand.u32 2147483647, %v52
    %v67 = vand.u32 2147483647, %v53
    %v68 = vsub.f32 0.0, %v66
    %v69 = vsub.f32 0.0, %v67
    %v70 = vmul.f32 %v68, 1.442695
    %v71 = vpow.pop %v70
    %v72 = vmul.f32 %v69, 1.442695
    %v73 = vpow.pop %v72
    %v74 = vadd.f32 %v71, 1.0
    %v75 = vlog2.pop %v74
    %v76 = vmul.f32 %v75, 0.6931472
    %v77 = vmul.f32 -0.5, %v71
    %v78 = vadd.f32 %v77, 1.0
    %v79 = vmul.f32 %v78, %v71
    %v80 = vand.u32 2147483647, %v71
    %vm81 = vcmp.lt.f32.partialorder %v80, 0.0004427343
    %v82 = vsel %vm81, %v79, %v76
    %v83 = vadd.f32 %v73, 1.0
    %v84 = vlog2.pop %v83
    %v85 = vmul.f32 %v84, 0.6931472
    %v86 = vmul.f32 -0.5, %v73
    %v87 = vadd.f32 %v86, 1.0
    %v88 = vmul.f32 %v87, %v73
    %v89 = vand.u32 2147483647, %v73
    %vm90 = vcmp.lt.f32.partialorder %v89, 0.0004427343
    %v91 = vsel %vm90, %v88, %v85
    %v92 = vadd.f32 %v64, %v82
    %v93 = vadd.f32 %v65, %v91
    %v94 = vld [vmem:[#allocation2] sm:$0xff]
    %v95 = vld [vmem:[#allocation2 + $0x8] sm:$0xff]
    %v96 = vadd.f32 %v94, %v92
    %v97 = vadd.f32 %v95, %v93
    %98 = vst [vmem:[#allocation2] sm:$0xff] %v96
    %99 = vst [vmem:[#allocation2 + $0x8] sm:$0xff] %v97
    // Predicated region
    $region22: #{tpu_custom_call.1} parent=1 // pred_check
      %p100 = pneg %p46
    $region23: #{tpu_custom_call.1} parent=1 // pred_check_branch
      %102 = sbr.rel (%p100) target = $region25
    $region24: #{tpu_custom_call.1} parent=1 // pred_region
      %v103 = vld [vmem:[#allocation2] sm:$0xff]
      %v104 = vld [vmem:[#allocation2 + $0x8] sm:$0xff]
      %v107 = vcombine.high %v103, %v103
      %v108 = vcombine.high %v104, %v104
      %vm111 = vcmask 1043456
      %v112 = vsel %vm111, %v103, 0.0
      %v113 = vsel %vm111, %v107, 0.0
      %v114 = vadd.f32 %v112, %v113
      %v115 = vsel %vm111, %v104, 0.0
      %v116 = vadd.f32 %v114, %v115
      %v117 = vsel %vm111, %v108, 0.0
      %v118 = vadd.f32 %v116, %v117
      %119 = vadd.xlane.f32.xlu0 %v118
      %v120 = vpop.xlane.xlu0 %119
      %v121 = vrot.slane %v120, 4
      %v122 = vadd.f32 %v120, %v121
      %v123 = vrot.slane %v122, 2
      %v124 = vadd.f32 %v122, %v123
      %v125 = vrot.slane %v124, 1
      %v126 = vadd.f32 %v124, %v125
      %s127 = vtos %v126
      %s128 = scalar_lea.smem [#allocation8], 0
      %129 = sst [smem:[%s128]] %s127
    $region25: #{tpu_custom_call.1} parent=1 // pred_fallthru
      _
    // Predicated region
    $region26: #{tpu_custom_call.1} parent=1 // pred_check
      _
    $region27: #{tpu_custom_call.1} parent=1 // pred_check_branch
      %131 = sbr.rel (0) target = $region29
    $region28: #{tpu_custom_call.1} parent=1 // pred_region
      %s133 = ssub.s32 16, 16
      %134 = vsyncadd [#allocation5], %s133
      %137 = dma.smem_to_hbm [#allocation8], 16, %s2, [#allocation5]
    $region29: #{tpu_custom_call.1} parent=1 // pred_fallthru
      _
    // Predicated region
    $region30: #{tpu_custom_call.1} parent=1 // pred_check
      _
    $region31: #{tpu_custom_call.1} parent=1 // pred_check_branch
      %139 = sbr.rel (0) target = $region33
    $region32: #{tpu_custom_call.1} parent=1 // pred_region
      %140 = dma.done [#allocation5], 16
    $region33: #{tpu_custom_call.1} parent=1 // pred_fallthru
      _
    %141 = sfence
    %142 = vsyncpa [#allocation4], 1
    %143 = vsyncpa [#allocation7], 1
    %144 = vsyncpa [#allocation5], 1

</llo_original>
